<compile_context>
chip_gen: v7x
topology: tpu7x:2x2x1
jax: 0.10.0
libtpu: 0.0.40
codegen_flags: <defaults>
</compile_context>

<pallas_src>
import functools

import jax
import jax.numpy as jnp
from jax.experimental import pallas as pl
from jax.experimental.pallas import tpu as pltpu

# ---- module hyper-parameters (defaults from AdaptiveLoss.__init__) ----------
ALPHA_LO = 0.001
ALPHA_HI = 1.999
SCALE_LO = 1e-05
SCALE_INIT = 1.0
EPS = 1e-06

DEFAULT_TILE_ROWS = 4096  # (4096, 128) f32 block = 2 MiB per input per buffer


def _cdiv(a, b):
    return (a + b - 1) // b


def _round_up(x, m):
    return ((x + m - 1) // m) * m


# ---- parameter initialization (mirrors the PyTorch __init__) -----------------
def _logit(y):
    return -jnp.log(1.0 / y - 1.0)


def _inv_affine_sigmoid(probs, lo=0.0, hi=1.0):
    return _logit((probs - lo) / (hi - lo))


def init_params():
    """Raw (pre-activation) alpha and scale params, like the nn.Parameter init."""
    alpha_init = (ALPHA_LO + ALPHA_HI) / 2.0
    alpha_raw = _inv_affine_sigmoid(
        jnp.asarray([alpha_init], dtype=jnp.bfloat16), lo=ALPHA_LO, hi=ALPHA_HI
    ).astype(jnp.float32)
    scale_raw = jnp.asarray([0.0], dtype=jnp.bfloat16).astype(jnp.float32)
    return jnp.concatenate([alpha_raw, scale_raw])  # shape (2,), f32


def _reparam(params):
    """Scalar reparameterizations (hoisted completely out of the kernel)."""
    alpha_raw = params[0].astype(jnp.float32)
    scale_raw = params[1].astype(jnp.float32)
    shift = jnp.log(jnp.expm1(jnp.float32(1.0)))  # inv_softplus(1.0)
    scale = (SCALE_INIT - SCALE_LO) * jnp.log1p(jnp.exp(scale_raw + shift)) + SCALE_LO
    alpha = jax.nn.sigmoid(alpha_raw) * (ALPHA_HI - ALPHA_LO) + ALPHA_LO
    b = jnp.abs(alpha - 2.0) + EPS
    d = jnp.where(alpha >= 0.0, alpha + EPS, alpha - EPS)
    return scale, alpha, b, d


# ---- Pallas kernel -----------------------------------------------------------
def _adaptive_loss_kernel(params_ref, pred_ref, target_ref, out_ref, acc_ref,
                          *, rows, needs_mask):
    c = pl.program_id(0)           # TensorCore split (parallel)
    i = pl.program_id(1)           # streamed reduction axis (arbitrary)

    @pl.when(i == 0)
    def _init():
        acc_ref[...] = jnp.zeros_like(acc_ref)

    inv = params_ref[0]            # 1 / (scale^2 * b)   (scalar, SMEM)
    half_d = params_ref[1]         # 0.5 * d             (scalar, SMEM)

    # ---- vector hot path ----------------------------------------------------
    x = pred_ref[...].astype(jnp.float32) - target_ref[...].astype(jnp.float32)

    if needs_mask:
        # Only the globally-last tile is ragged; mask garbage rows BEFORE the
        # log/exp so they contribute exactly 0 and cannot produce NaN/Inf.
        tile_r = x.shape[0]
        row_start = (c * pl.num_programs(1) + i) * tile_r
        local = jax.lax.broadcasted_iota(jnp.int32, x.shape, 0)
        x = jnp.where(local + row_start < rows, x, 0.0)

    z = x * x * inv + 1.0                       # z >= 1 always
    contrib = jnp.exp(half_d * jnp.log(z)) - 1.0  # == z**(d/2) - 1, 2 EUP ops
    # Fold the (tile_r,128) block into the small (8,128) accumulator with pure
    # per-vreg VPU adds (tile-aligned reshape -> no data movement).
    acc_ref[...] += contrib.reshape(-1, 8, 128).sum(axis=0)

    @pl.when(i == pl.num_programs(1) - 1)
    def _finalize():
        total = jnp.sum(acc_ref[...])           # single small cross-lane reduce
        out_ref[...] = jnp.broadcast_to(total, out_ref.shape)


# ---- wrapper -----------------------------------------------------------------
def adaptive_loss(pred, target, params, *, tile_rows=DEFAULT_TILE_ROWS):
    assert pred.shape == target.shape
    n = 1
    for s in pred.shape:
        n *= int(s)
    assert n > 0

    # Scalar reparameterization once, outside the kernel.
    scale, alpha, b, d = _reparam(params)
    inv = 1.0 / (scale * scale * b)   # folds both per-element divides into 1 mul
    half_d = 0.5 * d
    kparams = jnp.stack([inv, half_d]).astype(jnp.float32)  # (2,) -> SMEM

    # Streaming dtype: keep bf16 as bf16 (half the HBM bytes), else f32.
    if pred.dtype == jnp.bfloat16 and target.dtype == jnp.bfloat16:
        stream_dtype = jnp.bfloat16
        row_align = 16
    else:
        stream_dtype = jnp.float32
        row_align = 8
    itemsize = jnp.dtype(stream_dtype).itemsize

    # Lane-dense (rows, 128) slab; only a tiny tail pad when misaligned.
    pad_mult = 128 * row_align
    padded_n = _round_up(n, pad_mult)
    pred_flat = pred.reshape(-1).astype(stream_dtype)
    target_flat = target.reshape(-1).astype(stream_dtype)
    if padded_n != n:
        # < pad_mult zero elements; x=0 -> z=1 -> contribution exactly 0.
        pred_flat = jnp.pad(pred_flat, (0, padded_n - n))
        target_flat = jnp.pad(target_flat, (0, padded_n - n))
    rows = padded_n // 128
    pred2 = pred_flat.reshape(rows, 128)
    target2 = target_flat.reshape(rows, 128)

    # Tiling + optional 2-way TensorCore split (v7x megacore; harmless on 1-TC).
    if rows <= tile_rows:
        ncores, tiles_per_core, tile_r = 1, 1, rows
    else:
        ncores = 2 if rows >= 2 * tile_rows else 1
        tiles_per_core = _cdiv(rows, ncores * tile_rows)
        total = ncores * tiles_per_core
        tile_r = _round_up(_cdiv(rows, total), row_align)
        if (total - 1) * tile_r >= rows:
            # Pathological split (would create a fully out-of-bounds tile):
            # fall back to plain single-core cdiv tiling (always safe).
            ncores = 1
            tile_r = _round_up(tile_rows, row_align)
            tiles_per_core = _cdiv(rows, tile_r)
    total_tiles = ncores * tiles_per_core
    needs_mask = (total_tiles * tile_r != rows)

    kernel = functools.partial(_adaptive_loss_kernel, rows=rows,
                               needs_mask=needs_mask)

    out = pl.pallas_call(
        kernel,
        out_shape=jax.ShapeDtypeStruct((ncores, 8, 128), jnp.float32),
        grid=(ncores, tiles_per_core),
        in_specs=[
            pl.BlockSpec(memory_space=pltpu.MemorySpace.SMEM),   # (2,) scalars
            pl.BlockSpec((tile_r, 128), lambda c, i: (c * tiles_per_core + i, 0)),
            pl.BlockSpec((tile_r, 128), lambda c, i: (c * tiles_per_core + i, 0)),
        ],
        out_specs=pl.BlockSpec((1, 8, 128), lambda c, i: (c, 0, 0)),
        scratch_shapes=[pltpu.VMEM((8, 128), jnp.float32)],      # per-core accumulator
        compiler_params=pltpu.CompilerParams(
            dimension_semantics=("parallel", "arbitrary"),
            vmem_limit_bytes=32 * 1024 * 1024,
        ),
        cost_estimate=pl.CostEstimate(
            flops=9 * padded_n,
            transcendentals=2 * padded_n,                # exp + log per element
            bytes_accessed=2 * itemsize * padded_n + 8 + ncores * 8 * 128 * 4,
        ),
    )(kparams, pred2, target2)

    total_sum = jnp.sum(out[:, 0, 0])                    # sum per-core partials
    return (b / d) * total_sum / jnp.float32(n)          # mean reduction


# ---- pure-JAX reference for sanity checks -------------------------------------
def adaptive_loss_ref(pred, target, params):
    scale, alpha, b, d = _reparam(params)
    x = pred.astype(jnp.float32) - target.astype(jnp.float32)
    loss = (b / d) * (jnp.power((x / scale) ** 2 / b + 1.0, 0.5 * d) - 1.0)
    return jnp.mean(loss)


if __name__ == "__main__":
    key = jax.random.PRNGKey(0)
    k1, k2, k3, k4, k5, k6 = jax.random.split(key, 6)

    params = init_params()

    # 1) Small NCHW shape (module-typical): batch=2, channels=4, spatial=16.
    pred = jax.random.normal(k1, (2, 4, 16, 16), dtype=jnp.float32)
    target = jax.random.normal(k2, (2, 4, 16, 16), dtype=jnp.float32)
    out = jax.block_until_ready(adaptive_loss(pred, target, params))
    ref = adaptive_loss_ref(pred, target, params)
    assert jnp.isfinite(out), "kernel produced non-finite loss"
    assert jnp.allclose(out, ref, rtol=1e-4, atol=1e-5), (out, ref)

    # 2) Element count not a multiple of 1024: exercises the tiny tail-pad path.
    pred_odd = jax.random.normal(k3, (3, 5, 7, 11), dtype=jnp.float32)
    target_odd = jax.random.normal(k4, (3, 5, 7, 11), dtype=jnp.float32)
    out_odd = jax.block_until_ready(adaptive_loss(pred_odd, target_odd, params))
    ref_odd = adaptive_loss_ref(pred_odd, target_odd, params)
    assert jnp.isfinite(out_odd)
    assert jnp.allclose(out_odd, ref_odd, rtol=1e-4, atol=1e-5), (out_odd, ref_odd)

    # 3) Multi-tile + 2-core split + ragged-last-tile in-kernel mask path.
    pred_big = jax.random.normal(k5, (1, 9000, 128), dtype=jnp.float32)
    target_big = jax.random.normal(k6, (1, 9000, 128), dtype=jnp.float32)
    out_big = jax.block_until_ready(adaptive_loss(pred_big, target_big, params))
    ref_big = adaptive_loss_ref(pred_big, target_big, params)
    assert jnp.isfinite(out_big)
    assert jnp.allclose(out_big, ref_big, rtol=5e-4, atol=1e-5), (out_big, ref_big)

    print("KERNEL_OK")
</pallas_src>

<mosaic_0001>
module attributes {stable_mosaic.version = 11 : i64} {
  func.func @_adaptive_loss_kernel(%arg0: i32, %arg1: i32, %arg2: memref<2xf32, #tpu.memory_space<smem>>, %arg3: memref<16x128xf32, #tpu.memory_space<vmem>>, %arg4: memref<16x128xf32, #tpu.memory_space<vmem>>, %arg5: memref<1x8x128xf32, #tpu.memory_space<vmem>>, %arg6: memref<8x128xf32, #tpu.memory_space<vmem>>) attributes {dimension_semantics = [#tpu.dimension_semantics<parallel>, #tpu.dimension_semantics<arbitrary>], iteration_bounds = array<i64: 1, 1>, scalar_prefetch = 0 : i64, scratch_operands = 1 : i64, tpu.core_type = #tpu.core_type<tc>, window_params = [{transform_indices = @transform_0, window_bounds = array<i64: 2>}, {transform_indices = @transform_1, window_bounds = array<i64: 16, 128>}, {transform_indices = @transform_2, window_bounds = array<i64: 16, 128>}, {transform_indices = @transform_3, window_bounds = array<i64: 1, 8, 128>}]} {
    %c0_i32 = arith.constant 0 : i32
    %0 = arith.cmpi eq, %arg1, %c0_i32 : i32
    %1 = arith.extui %0 : i1 to i32
    %c0_i32_0 = arith.constant 0 : i32
    %2 = arith.cmpi ne, %1, %c0_i32_0 : i32
    scf.if %2 {
      %cst_13 = arith.constant 0.000000e+00 : f32
      %27 = vector.broadcast %cst_13 : f32 to vector<8x128xf32>
      %c0_14 = arith.constant 0 : index
      %c0_15 = arith.constant 0 : index
      %28 = vector.load %arg6[%c0_14, %c0_15] : memref<8x128xf32, #tpu.memory_space<vmem>>, vector<8x128xf32>
      tpu.vector_store %arg6[%c0_14, %c0_15], %27 {strides = array<i32>} : memref<8x128xf32, #tpu.memory_space<vmem>>, vector<8x128xf32>,
    } else {
    }
    %c0 = arith.constant 0 : index
    %3 = memref.load %arg2[%c0] : memref<2xf32, #tpu.memory_space<smem>>
    %c1 = arith.constant 1 : index
    %4 = memref.load %arg2[%c1] : memref<2xf32, #tpu.memory_space<smem>>
    %c0_1 = arith.constant 0 : index
    %c0_2 = arith.constant 0 : index
    %5 = vector.load %arg3[%c0_1, %c0_2] : memref<16x128xf32, #tpu.memory_space<vmem>>, vector<16x128xf32>
    %c0_3 = arith.constant 0 : index
    %c0_4 = arith.constant 0 : index
    %6 = vector.load %arg4[%c0_3, %c0_4] : memref<16x128xf32, #tpu.memory_space<vmem>>, vector<16x128xf32>
    %7 = arith.subf %5, %6 : vector<16x128xf32>
    %8 = arith.mulf %7, %7 : vector<16x128xf32>
    %9 = vector.broadcast %3 : f32 to vector<16x128xf32>
    %10 = arith.mulf %8, %9 : vector<16x128xf32>
    %cst = arith.constant 1.000000e+00 : f32
    %11 = vector.broadcast %cst : f32 to vector<16x128xf32>
    %12 = arith.addf %10, %11 : vector<16x128xf32>
    %13 = math.log %12 : vector<16x128xf32>
    %14 = vector.broadcast %4 : f32 to vector<16x128xf32>
    %15 = arith.mulf %14, %13 : vector<16x128xf32>
    %16 = math.exp %15 : vector<16x128xf32>
    %cst_5 = arith.constant 1.000000e+00 : f32
    %17 = vector.broadcast %cst_5 : f32 to vector<16x128xf32>
    %18 = arith.subf %16, %17 : vector<16x128xf32>
    %c0_6 = arith.constant 0 : index
    %c0_7 = arith.constant 0 : index
    %19 = vector.load %arg6[%c0_6, %c0_7] : memref<8x128xf32, #tpu.memory_space<vmem>>, vector<8x128xf32>
    %20 = vector.shape_cast %18 : vector<16x128xf32> to vector<2x8x128xf32>
    %cst_8 = arith.constant dense<0.000000e+00> : vector<8x128xf32>
    %21 = vector.multi_reduction <add>, %20, %cst_8 [0] : vector<2x8x128xf32> to vector<8x128xf32>
    %22 = arith.addf %19, %21 : vector<8x128xf32>
    %c0_9 = arith.constant 0 : index
    %c0_10 = arith.constant 0 : index
    %23 = vector.load %arg6[%c0_9, %c0_10] : memref<8x128xf32, #tpu.memory_space<vmem>>, vector<8x128xf32>
    tpu.vector_store %arg6[%c0_9, %c0_10], %22 {strides = array<i32>} : memref<8x128xf32, #tpu.memory_space<vmem>>, vector<8x128xf32>,
    %c0_i32_11 = arith.constant 0 : i32
    %24 = arith.cmpi eq, %arg1, %c0_i32_11 : i32
    %25 = arith.extui %24 : i1 to i32
    %c0_i32_12 = arith.constant 0 : i32
    %26 = arith.cmpi ne, %25, %c0_i32_12 : i32
    scf.if %26 {
      %c0_13 = arith.constant 0 : index
      %c0_14 = arith.constant 0 : index
      %27 = vector.load %arg6[%c0_13, %c0_14] : memref<8x128xf32, #tpu.memory_space<vmem>>, vector<8x128xf32>
      %28 = vector.shape_cast %27 : vector<8x128xf32> to vector<1x8x128xf32>
      %cst_15 = arith.constant dense<0.000000e+00> : vector<1xf32>
      %29 = vector.multi_reduction <add>, %28, %cst_15 [1, 2] : vector<1x8x128xf32> to vector<1xf32>
      %30 = vector.shape_cast %29 : vector<1xf32> to vector<1x1x1xf32>
      %31 = vector.extract %30[0, 0, 0] : f32 from vector<1x1x1xf32>
      %32 = vector.broadcast %31 : f32 to vector<1x8x128xf32>
      %c0_16 = arith.constant 0 : index
      %c0_17 = arith.constant 0 : index
      %c0_18 = arith.constant 0 : index
      %33 = vector.load %arg5[%c0_16, %c0_17, %c0_18] : memref<1x8x128xf32, #tpu.memory_space<vmem>>, vector<1x8x128xf32>
      tpu.vector_store %arg5[%c0_16, %c0_17, %c0_18], %32 {strides = array<i32>} : memref<1x8x128xf32, #tpu.memory_space<vmem>>, vector<1x8x128xf32>,
    } else {
    }
    return
  }
  func.func @transform_0(%arg0: i32, %arg1: i32) -> i32 {
    %c0_i32 = arith.constant 0 : i32
    %c0_i32_0 = arith.constant 0 : i32
    return %c0_i32 : i32
  }
  func.func @transform_1(%arg0: i32, %arg1: i32) -> (i32, i32) {
    %c1_i32 = arith.constant 1 : i32
    %0 = arith.muli %arg0, %c1_i32 : i32
    %1 = arith.addi %0, %arg1 : i32
    %c0_i32 = arith.constant 0 : i32
    %c0_i32_0 = arith.constant 0 : i32
    return %1, %c0_i32 : i32, i32
  }
  func.func @transform_2(%arg0: i32, %arg1: i32) -> (i32, i32) {
    %c1_i32 = arith.constant 1 : i32
    %0 = arith.muli %arg0, %c1_i32 : i32
    %1 = arith.addi %0, %arg1 : i32
    %c0_i32 = arith.constant 0 : i32
    %c0_i32_0 = arith.constant 0 : i32
    return %1, %c0_i32 : i32, i32
  }
  func.func @transform_3(%arg0: i32, %arg1: i32) -> (i32, i32, i32) {
    %c0_i32 = arith.constant 0 : i32
    %c0_i32_0 = arith.constant 0 : i32
    %c0_i32_1 = arith.constant 0 : i32
    return %arg0, %c0_i32, %c0_i32_0 : i32, i32, i32
  }
}

</mosaic_0001>

<llo_original>
// kernel: tpu_custom_call.1
$region0: #{tpu_custom_call.1}
  #allocation0 [shape = 'u32[]', space=smem, size = 0x4, offset = 0x4, fixed_abs, tag = 'smem constant byte address 0x4 - core index']
  #allocation1 [shape = 'u32[144,128]{1,0:T(1,128)}', space=vmem, size = 0x12000, scoped, tag = 'internal scratch']
  #allocation2 [shape = 'f32[8,128]{1,0:T(8,128)}', space=vmem, size = 0x1000, scoped, tag = 'scratch operand']
  %s0 = inlined_call_operand.hbm [shape: f32[2], index: 0, kind: input, shape index: {}]
  %s1 = inlined_call_operand.hbm [shape: f32[16,128], index: 1, kind: input, shape index: {}]
  %s2 = inlined_call_operand.hbm [shape: f32[16,128], index: 2, kind: input, shape index: {}]
  %s3 = inlined_call_operand.hbm [shape: f32[1,8,128], index: 3, kind: output, shape index: {}]
  %s4 = sld [smem:[#allocation0]]
  $region42: #{tpu_custom_call.1} parent=0
    _
  %s6 = ssub.s32 1, %s4
  %s7 = scalar_select 0, %s6, %s4
  $region1: #{tpu_custom_call.1} parent=0
    #allocation3 [shape = 'u8[512]{0}', space=smem, size = 0x200, scoped, tag = 'input window, operand 0, single buffered']
    #allocation4 [shape = 's32[1]{0}', space=sflag, size = 0x4, scoped, tag = 'scoped memory for tpu_custom_call.1']
    #allocation5 [shape = 's32[1]{0}', space=sflag, size = 0x4, scoped, tag = 'scoped memory for tpu_custom_call.1']
    #allocation6 [shape = 's32[1]{0}', space=sflag, size = 0x4, scoped, tag = 'scoped memory for tpu_custom_call.1']
    #allocation7 [shape = 'u8[8192]{0}', space=vmem, size = 0x2000, scoped, tag = 'input window, operand 1, single buffered']
    #allocation8 [shape = 'u8[8192]{0}', space=vmem, size = 0x2000, scoped, tag = 'input window, operand 2, single buffered']
    #allocation9 [shape = 's32[1]{0}', space=sflag, size = 0x4, scoped, tag = 'scoped memory for tpu_custom_call.1']
    #allocation10 [shape = 'u8[4096]{0}', space=vmem, size = 0x1000, scoped, tag = 'output window, operand 0, single buffered']
    %8 = vsyncpa [#allocation6], 0
    %9 = vsyncpa [#allocation4], 0
    %10 = vsyncpa [#allocation9], 0
    %11 = vsyncpa [#allocation5], 0
    // Predicated region
    $region2: #{tpu_custom_call.1} parent=1 // pred_check
      _
    $region3: #{tpu_custom_call.1} parent=1 // pred_check_branch
      %13 = sbr.rel (0) target = $region5
    $region4: #{tpu_custom_call.1} parent=1 // pred_region
      %s15 = ssub.s32 16, 16
      %16 = vsyncadd [#allocation6], %s15
      %19 = dma.hbm_to_smem %s0, 16, [#allocation3], [#allocation6]
    $region5: #{tpu_custom_call.1} parent=1 // pred_fallthru
      _
    // Predicated region
    $region6: #{tpu_custom_call.1} parent=1 // pred_check
      _
    $region7: #{tpu_custom_call.1} parent=1 // pred_check_branch
      %21 = sbr.rel (0) target = $region9
    $region8: #{tpu_custom_call.1} parent=1 // pred_region
      %s22 = sadd.s32 0, 0
      %s23 = smul.u32 2, %s22
      %s25 = ssub.s32 256, 256
      %26 = vsyncadd [#allocation4], %s25
      %s27 = smul.addr %s23, 128
      %s28 = scalar_lea.hbm %s1, %s27
      %s29 = sshll.u32 [#allocation7], 4
      %s30 = int_to_ptr.vmem [resolvable:$true] %s29
      %35 = dma.hbm_to_vmem [thread:$0]  %s28, 256, %s30, [#allocation4], 128, 128, 8
    $region9: #{tpu_custom_call.1} parent=1 // pred_fallthru
      _
    // Predicated region
    $region10: #{tpu_custom_call.1} parent=1 // pred_check
      _
    $region11: #{tpu_custom_call.1} parent=1 // pred_check_branch
      %37 = sbr.rel (0) target = $region13
    $region12: #{tpu_custom_call.1} parent=1 // pred_region
      %s38 = sadd.s32 0, 0
      %s39 = smul.u32 2, %s38
      %s41 = ssub.s32 256, 256
      %42 = vsyncadd [#allocation9], %s41
      %s43 = smul.addr %s39, 128
      %s44 = scalar_lea.hbm %s2, %s43
      %s45 = sshll.u32 [#allocation8], 4
      %s46 = int_to_ptr.vmem [resolvable:$true] %s45
      %51 = dma.hbm_to_vmem [thread:$0]  %s44, 256, %s46, [#allocation9], 128, 128, 8
    $region13: #{tpu_custom_call.1} parent=1 // pred_fallthru
      _
    // Predicated region
    $region14: #{tpu_custom_call.1} parent=1 // pred_check
      _
    $region15: #{tpu_custom_call.1} parent=1 // pred_check_branch
      %53 = sbr.rel (0) target = $region17
    $region16: #{tpu_custom_call.1} parent=1 // pred_region
      %54 = dma.done [#allocation6], 16
    $region17: #{tpu_custom_call.1} parent=1 // pred_fallthru
      _
    // Predicated region
    $region18: #{tpu_custom_call.1} parent=1 // pred_check
      _
    $region19: #{tpu_custom_call.1} parent=1 // pred_check_branch
      %56 = sbr.rel (0) target = $region21
    $region20: #{tpu_custom_call.1} parent=1 // pred_region
      %57 = dma.done [#allocation4], 256
    $region21: #{tpu_custom_call.1} parent=1 // pred_fallthru
      _
    // Predicated region
    $region22: #{tpu_custom_call.1} parent=1 // pred_check
      _
    $region23: #{tpu_custom_call.1} parent=1 // pred_check_branch
      %59 = sbr.rel (0) target = $region25
    $region24: #{tpu_custom_call.1} parent=1 // pred_region
      %60 = dma.done [#allocation9], 256
    $region25: #{tpu_custom_call.1} parent=1 // pred_fallthru
      _
    %61 = sfence
    %s62 = sadd.s32 0, 0
    %s63 = smul.u32 2, %s62
    %s64 = sadd.s32 0, 0
    %s65 = smul.u32 2, %s64
    %p66 = scmp.eq.s32.totalorder 0, 0
    // Predicated region
    $region26: #{tpu_custom_call.1} parent=1 // pred_check
      %p67 = pneg %p66
    $region27: #{tpu_custom_call.1} parent=1 // pred_check_branch
      %69 = sbr.rel (%p67) target = $region29
    $region28: #{tpu_custom_call.1} parent=1 // pred_region
      %70 = vst [vmem:[#allocation2] sm:$0xff] 0.0
    $region29: #{tpu_custom_call.1} parent=1 // pred_fallthru
      _
    %s71 = sld [smem:[#allocation3]]
    %s72 = sld [smem:[#allocation3 + $0x1]]
    %v73 = vld [vmem:[#allocation7] sm:$0xff]
    %v74 = vld [vmem:[#allocation7 + $0x8] sm:$0xff]
    %v75 = vld [vmem:[#allocation8] sm:$0xff]
    %v76 = vld [vmem:[#allocation8 + $0x8] sm:$0xff]
    %v77 = vsub.f32 %v73, %v75
    %v78 = vsub.f32 %v74, %v76
    %v79 = vmul.f32 %v77, %v77
    %v80 = vmul.f32 %v78, %v78
    %v81 = vstv %s71
    %v82 = vmul.f32 %v79, %v81
    %v83 = vmul.f32 %v80, %v81
    %v84 = vadd.f32 %v82, 1.0
    %v85 = vadd.f32 %v83, 1.0
    %v86 = vlog2.pop %v84
    %v87 = vmul.f32 %v86, 0.6931472
    %v88 = vlog2.pop %v85
    %v89 = vmul.f32 %v88, 0.6931472
    %v90 = vstv %s72
    %v91 = vmul.f32 %v90, %v87
    %v92 = vmul.f32 %v90, %v89
    %v93 = vmul.f32 %v91, 1.442695
    %v94 = vpow.pop %v93
    %v95 = vmul.f32 %v92, 1.442695
    %v96 = vpow.pop %v95
    %v97 = vsub.f32 %v94, 1.0
    %v98 = vsub.f32 %v96, 1.0
    %v99 = vld [vmem:[#allocation2] sm:$0xff]
    %v100 = vadd.f32 %v97, %v98
    %v101 = vadd.f32 %v99, %v100
    %102 = vst [vmem:[#allocation2] sm:$0xff] %v101
    // Predicated region
    $region30: #{tpu_custom_call.1} parent=1 // pred_check
      %p103 = pneg %p66
    $region31: #{tpu_custom_call.1} parent=1 // pred_check_branch
      %105 = sbr.rel (%p103) target = $region33
    $region32: #{tpu_custom_call.1} parent=1 // pred_region
      %v106 = vld [vmem:[#allocation2] sm:$0xff]
      %107 = vadd.xlane.f32.xlu0 %v106
      %v108 = vpop.xlane.xlu0 %107
      %v109 = vrot.slane %v108, 4
      %v110 = vadd.f32 %v108, %v109
      %v111 = vrot.slane %v110, 2
      %v112 = vadd.f32 %v110, %v111
      %v113 = vrot.slane %v112, 1
      %v114 = vadd.f32 %v112, %v113
      %s115 = vtos %v114
      %v116 = vstv %s115
      %117 = vst [vmem:[#allocation10] sm:$0xff] %v116
    $region33: #{tpu_custom_call.1} parent=1 // pred_fallthru
      _
    // Predicated region
    $region34: #{tpu_custom_call.1} parent=1 // pred_check
      _
    $region35: #{tpu_custom_call.1} parent=1 // pred_check_branch
      %119 = sbr.rel (0) target = $region37
    $region36: #{tpu_custom_call.1} parent=1 // pred_region
      %s121 = ssub.s32 128, 128
      %122 = vsyncadd [#allocation5], %s121
      %s124 = sshll.u32 [#allocation10], 4
      %s125 = int_to_ptr.vmem [resolvable:$true] %s124
      %127 = dma.vmem_to_hbm [thread:$0]  %s125, 128, %s3, [#allocation5]
    $region37: #{tpu_custom_call.1} parent=1 // pred_fallthru
      _
    // Predicated region
    $region38: #{tpu_custom_call.1} parent=1 // pred_check
      _
    $region39: #{tpu_custom_call.1} parent=1 // pred_check_branch
      %129 = sbr.rel (0) target = $region41
    $region40: #{tpu_custom_call.1} parent=1 // pred_region
      %130 = dma.done [#allocation5], 128
    $region41: #{tpu_custom_call.1} parent=1 // pred_fallthru
      _
    %131 = vsyncpa [#allocation4], 1
    %132 = vsyncpa [#allocation9], 1
    %133 = vsyncpa [#allocation5], 1
    %134 = vsyncpa [#allocation6], 1

</llo_original>
